<compile_context>
chip_gen: v7x
topology: tpu7x:2x2x1
jax: 0.10.0
libtpu: 0.0.40
codegen_flags: <defaults>
</compile_context>

<pallas_src>
import math

import jax
import jax.numpy as jnp
from jax import lax
from jax.experimental import pallas as pl
from jax.experimental.pallas import tpu as pltpu

HIDDEN_DIM = 128
X_CONCAT_DIM = 3
C_CONST = 10.0
_NEG_PAD = -1e30          # additive mask value for padded (non-existent) nodes
_MAX_TILE = 1024          # rows of X per grid step (1024*128*4B = 512 KiB per block)


def _round_up(a, b):
    return (a + b - 1) // b * b


# ---------------------------------------------------------------------------
# Kernels
# ---------------------------------------------------------------------------
def _decoder_attn_kernel(w_ref, X_ref, mask_ref, Wvo_ref, out_ref,
                         m_sc, l_sc, acc_sc):
    """Non-final layer: online-softmax attention readout -> [1, hidden_dim].

    Per block:  u = X_blk @ w  (w = q@Wk.T/sqrt(H)),  logits = u + mask_blk,
    online softmax with running (max, sum) and accumulator acc = p @ X_blk.
    On last grid step:  out = (acc / l) @ (Wv @ Wo).
    """
    i = pl.program_id(0)

    @pl.when(i == 0)
    def _():
        m_sc[...] = jnp.full_like(m_sc, -jnp.inf)
        l_sc[...] = jnp.zeros_like(l_sc)
        acc_sc[...] = jnp.zeros_like(acc_sc)

    # u[0, j] = w . X_blk[j]   ('qd,kd->qk' contraction; scale folded into w)
    u = lax.dot_general(w_ref[...], X_ref[...],
                        dimension_numbers=(((1,), (1,)), ((), ())),
                        preferred_element_type=jnp.float32)            # [1, TB]
    logits = u + mask_ref[...]                                         # [1, TB]

    m_prev = m_sc[...]                                                 # [1, 1]
    m_new = jnp.maximum(m_prev, jnp.max(logits, axis=1, keepdims=True))
    alpha = jnp.exp(m_prev - m_new)
    p = jnp.exp(logits - m_new)                                        # [1, TB]
    l_sc[...] = alpha * l_sc[...] + jnp.sum(p, axis=1, keepdims=True)
    acc_sc[...] = alpha * acc_sc[...] + jnp.dot(
        p, X_ref[...], preferred_element_type=jnp.float32)             # [1, H]
    m_sc[...] = m_new

    @pl.when(i == pl.num_programs(0) - 1)
    def _():
        h = acc_sc[...] * pl.reciprocal(l_sc[...], approx=True)        # softmax(u) @ X
        out_ref[...] = jnp.dot(h, Wvo_ref[...],
                               preferred_element_type=jnp.float32)     # (p@X)@(Wv@Wo)


def _decoder_final_kernel(w_ref, X_ref, mask_ref, out_ref):
    """Final layer: C * tanh(u) + mask for one node block -> [1, TB]."""
    u = lax.dot_general(w_ref[...], X_ref[...],
                        dimension_numbers=(((1,), (1,)), ((), ())),
                        preferred_element_type=jnp.float32)            # [1, TB]
    out_ref[...] = C_CONST * jnp.tanh(u) + mask_ref[...]


# ---------------------------------------------------------------------------
# Per-model precomputation (done once, reused across decode steps)
# ---------------------------------------------------------------------------
def precompute_decoder_constants(params):
    H = HIDDEN_DIM
    Wq = params["Wq"].astype(jnp.float32)
    q_bias = (params["starting_node_W"].reshape(1, H).astype(jnp.float32) @ Wq[H:2 * H]
              + params["previous_node_W"].reshape(1, H).astype(jnp.float32) @ Wq[2 * H:3 * H])
    return {
        "Wq_x": Wq[:H],                                                   # [H, H]
        "q_bias": q_bias,                                                 # [1, H]
        "WkT_scaled": params["Wk"].astype(jnp.float32).T / math.sqrt(H),  # [H, H]
        "Wvo": params["Wv"].astype(jnp.float32)
               @ params["Wo"].astype(jnp.float32),                        # [H, H]
    }


# ---------------------------------------------------------------------------
# Forward wrapper (mirrors Decoder.forward, starting_node=None, use_adj=False)
# ---------------------------------------------------------------------------
def decoder_forward(params, X, nodes_visited, x, final_layer=False, cache=None):
    n = X.shape[0]
    H = HIDDEN_DIM
    if cache is None:
        cache = precompute_decoder_constants(params)

    # Tiling geometry: pad node axis to a lane-dense multiple of 128; tile <= 1024.
    TB = min(_MAX_TILE, _round_up(max(n, 1), 128))
    n_pad = _round_up(n, TB)
    grid = n_pad // TB

    Xp = jnp.zeros((n_pad, H), jnp.float32).at[:n].set(X.astype(jnp.float32))

    # Additive mask (same semantics as the python loop in the original forward);
    # padded columns get a huge negative so they vanish in the softmax.
    mask = jnp.full((1, n_pad), _NEG_PAD, jnp.float32)
    mask = mask.at[0, :n].set(1.0)
    if len(nodes_visited) > 0:
        idx = jnp.asarray(nodes_visited, jnp.int32)
        mask = mask.at[0, idx].set(0.0)

    # q = concat([x, start, prev]) @ Wq  ==  x @ Wq[:H] + q_bias ; w = q @ Wk.T / sqrt(H)
    q = x.reshape(1, H).astype(jnp.float32) @ cache["Wq_x"] + cache["q_bias"]
    w = q @ cache["WkT_scaled"]                                          # [1, H]

    if final_layer:
        out = pl.pallas_call(
            _decoder_final_kernel,
            out_shape=jax.ShapeDtypeStruct((1, n_pad), jnp.float32),
            grid_spec=pltpu.PrefetchScalarGridSpec(
                num_scalar_prefetch=0,
                grid=(grid,),
                in_specs=[pl.BlockSpec((1, H), lambda i: (0, 0)),        # w
                          pl.BlockSpec((TB, H), lambda i: (i, 0)),       # X tile
                          pl.BlockSpec((1, TB), lambda i: (0, i))],      # mask tile
                out_specs=pl.BlockSpec((1, TB), lambda i: (0, i))),
            compiler_params=pltpu.CompilerParams(
                dimension_semantics=("parallel",)),
        )(w, Xp, mask)
        return out[0, :n]                                                # [n_nodes]
    else:
        out = pl.pallas_call(
            _decoder_attn_kernel,
            out_shape=jax.ShapeDtypeStruct((1, H), jnp.float32),
            grid_spec=pltpu.PrefetchScalarGridSpec(
                num_scalar_prefetch=0,
                grid=(grid,),
                in_specs=[pl.BlockSpec((1, H), lambda i: (0, 0)),        # w
                          pl.BlockSpec((TB, H), lambda i: (i, 0)),       # X tile
                          pl.BlockSpec((1, TB), lambda i: (0, i)),       # mask tile
                          pl.BlockSpec((H, H), lambda i: (0, 0))],       # Wv @ Wo
                out_specs=pl.BlockSpec((1, H), lambda i: (0, 0)),
                scratch_shapes=[pltpu.VMEM((1, 1), jnp.float32),         # running max
                                pltpu.VMEM((1, 1), jnp.float32),         # running sum
                                pltpu.VMEM((1, H), jnp.float32)]),       # p @ X acc
            compiler_params=pltpu.CompilerParams(
                dimension_semantics=("arbitrary",)),
        )(w, Xp, mask, cache["Wvo"])
        return out.reshape(-1)                                           # [hidden_dim]


# ---------------------------------------------------------------------------
# Pure-JAX reference (original formulation, for correctness checking)
# ---------------------------------------------------------------------------
def decoder_reference(params, X, nodes_visited, x, final_layer=False):
    n_nodes = X.shape[0]
    H = HIDDEN_DIM
    feats = jnp.concatenate([x, params["starting_node_W"], params["previous_node_W"]])
    q = feats @ params["Wq"]
    k = X @ params["Wk"]
    v = X @ params["Wv"]
    u = (q @ k.T).reshape(1, n_nodes) / math.sqrt(H)
    mask = jnp.ones((1, n_nodes), jnp.float32)
    if len(nodes_visited) > 0:
        mask = mask.at[0, jnp.asarray(nodes_visited, jnp.int32)].set(0.0)
    if final_layer:
        return (C_CONST * jnp.tanh(u) + mask).reshape(-1)
    u_ = jax.nn.softmax(u + mask, axis=1)
    h = u_ @ v
    return (h @ params["Wo"]).reshape(-1)


# ---------------------------------------------------------------------------
# Deterministic parameter init (matches __init__ shapes & uniform range)
# ---------------------------------------------------------------------------
def init_params(key):
    bound = 1.0 / math.sqrt(HIDDEN_DIM)
    ks = jax.random.split(key, 6)
    u = lambda k, shape: jax.random.uniform(k, shape, jnp.float32, -bound, bound)
    return {
        "Wq": u(ks[0], (X_CONCAT_DIM * HIDDEN_DIM, HIDDEN_DIM)),
        "Wk": u(ks[1], (HIDDEN_DIM, HIDDEN_DIM)),
        "Wv": u(ks[2], (HIDDEN_DIM, HIDDEN_DIM)),
        "Wo": u(ks[3], (HIDDEN_DIM, HIDDEN_DIM)),
        "starting_node_W": u(ks[4], (HIDDEN_DIM,)),
        "previous_node_W": u(ks[5], (HIDDEN_DIM,)),
    }


if __name__ == "__main__":
    key = jax.random.PRNGKey(0)
    k_params, k_x1, k_x2 = jax.random.split(key, 3)

    params = init_params(k_params)
    cache = precompute_decoder_constants(params)

    # small graph (single block) and a larger graph (multi-block online softmax)
    for n_nodes, kx in ((16, k_x1), (1500, k_x2)):
        X = jax.random.normal(kx, (n_nodes, HIDDEN_DIM), jnp.float32)
        x = X.mean(axis=0)                      # as in "1st run": x = X.mean(dim=0)
        nodes_visited = [0, 3, 5, n_nodes - 1]

        # Non-final-layer path
        out = decoder_forward(params, X, nodes_visited, x, final_layer=False, cache=cache)
        out = jax.block_until_ready(out)
        ref = decoder_reference(params, X, nodes_visited, x, final_layer=False)
        assert out.shape == (HIDDEN_DIM,)
        assert jnp.allclose(out, ref, atol=5e-3, rtol=5e-3), \
            float(jnp.max(jnp.abs(out - ref)))

        # Final-layer path
        out_f = decoder_forward(params, X, nodes_visited, x, final_layer=True, cache=cache)
        out_f = jax.block_until_ready(out_f)
        ref_f = decoder_reference(params, X, nodes_visited, x, final_layer=True)
        assert out_f.shape == (n_nodes,)
        assert jnp.allclose(out_f, ref_f, atol=1e-3, rtol=1e-3), \
            float(jnp.max(jnp.abs(out_f - ref_f)))

    print("KERNEL_OK")
</pallas_src>

<mosaic_0001>
module attributes {stable_mosaic.version = 11 : i64} {
  func.func @_decoder_attn_kernel(%arg0: i32, %arg1: memref<1x128xf32, #tpu.memory_space<vmem>>, %arg2: memref<128x128xf32, #tpu.memory_space<vmem>>, %arg3: memref<1x128xf32, #tpu.memory_space<vmem>>, %arg4: memref<128x128xf32, #tpu.memory_space<vmem>>, %arg5: memref<1x128xf32, #tpu.memory_space<vmem>>, %arg6: memref<1x1xf32, #tpu.memory_space<vmem>>, %arg7: memref<1x1xf32, #tpu.memory_space<vmem>>, %arg8: memref<1x128xf32, #tpu.memory_space<vmem>>) attributes {dimension_semantics = [#tpu.dimension_semantics<arbitrary>], iteration_bounds = array<i64: 1>, scalar_prefetch = 0 : i64, scratch_operands = 3 : i64, tpu.core_type = #tpu.core_type<tc>, window_params = [{pipeline_mode = #tpu.pipeline_mode<synchronous>, transform_indices = @transform_0, window_bounds = array<i64: 1, 128>}, {transform_indices = @transform_1, window_bounds = array<i64: 128, 128>}, {transform_indices = @transform_2, window_bounds = array<i64: 1, 128>}, {pipeline_mode = #tpu.pipeline_mode<synchronous>, transform_indices = @transform_3, window_bounds = array<i64: 128, 128>}, {pipeline_mode = #tpu.pipeline_mode<synchronous>, transform_indices = @transform_4, window_bounds = array<i64: 1, 128>}]} {
    %c0_i32 = arith.constant 0 : i32
    %0 = arith.cmpi eq, %arg0, %c0_i32 : i32
    %1 = arith.extui %0 : i1 to i32
    %c0_i32_0 = arith.constant 0 : i32
    %2 = arith.cmpi ne, %1, %c0_i32_0 : i32
    scf.if %2 {
      %cst_25 = arith.constant 0xFF800000 : f32
      %34 = vector.broadcast %cst_25 : f32 to vector<1x1xf32>
      %c0_26 = arith.constant 0 : index
      %c0_27 = arith.constant 0 : index
      %35 = vector.load %arg6[%c0_26, %c0_27] : memref<1x1xf32, #tpu.memory_space<vmem>>, vector<1x1xf32>
      tpu.vector_store %arg6[%c0_26, %c0_27], %34 {strides = array<i32>} : memref<1x1xf32, #tpu.memory_space<vmem>>, vector<1x1xf32>,
      %cst_28 = arith.constant 0.000000e+00 : f32
      %36 = vector.broadcast %cst_28 : f32 to vector<1x1xf32>
      %c0_29 = arith.constant 0 : index
      %c0_30 = arith.constant 0 : index
      %37 = vector.load %arg7[%c0_29, %c0_30] : memref<1x1xf32, #tpu.memory_space<vmem>>, vector<1x1xf32>
      tpu.vector_store %arg7[%c0_29, %c0_30], %36 {strides = array<i32>} : memref<1x1xf32, #tpu.memory_space<vmem>>, vector<1x1xf32>,
      %cst_31 = arith.constant 0.000000e+00 : f32
      %38 = vector.broadcast %cst_31 : f32 to vector<1x128xf32>
      %c0_32 = arith.constant 0 : index
      %c0_33 = arith.constant 0 : index
      %39 = vector.load %arg8[%c0_32, %c0_33] : memref<1x128xf32, #tpu.memory_space<vmem>>, vector<1x128xf32>
      tpu.vector_store %arg8[%c0_32, %c0_33], %38 {strides = array<i32>} : memref<1x128xf32, #tpu.memory_space<vmem>>, vector<1x128xf32>,
    } else {
    }
    %c0 = arith.constant 0 : index
    %c0_1 = arith.constant 0 : index
    %3 = vector.load %arg1[%c0, %c0_1] : memref<1x128xf32, #tpu.memory_space<vmem>>, vector<1x128xf32>
    %c0_2 = arith.constant 0 : index
    %c0_3 = arith.constant 0 : index
    %4 = vector.load %arg2[%c0_2, %c0_3] : memref<128x128xf32, #tpu.memory_space<vmem>>, vector<128x128xf32>
    %cst = arith.constant dense<0.000000e+00> : vector<1x128xf32>
    %5 = tpu.matmul %3, %4, %cst {dimension_numbers = #tpu.dot_dimension_numbers<[1], [1], [0], [0], [0, 0, 1, 0], [], []>} : vector<1x128xf32>, vector<128x128xf32>, vector<1x128xf32> -> vector<1x128xf32>
    %c0_4 = arith.constant 0 : index
    %c0_5 = arith.constant 0 : index
    %6 = vector.load %arg3[%c0_4, %c0_5] : memref<1x128xf32, #tpu.memory_space<vmem>>, vector<1x128xf32>
    %7 = arith.addf %5, %6 : vector<1x128xf32>
    %c0_6 = arith.constant 0 : index
    %c0_7 = arith.constant 0 : index
    %8 = vector.load %arg6[%c0_6, %c0_7] : memref<1x1xf32, #tpu.memory_space<vmem>>, vector<1x1xf32>
    %cst_8 = arith.constant dense<0xFF800000> : vector<1xf32>
    %9 = vector.multi_reduction <maximumf>, %7, %cst_8 [1] : vector<1x128xf32> to vector<1xf32>
    %10 = vector.shape_cast %9 : vector<1xf32> to vector<1x1xf32>
    %11 = arith.maximumf %8, %10 : vector<1x1xf32>
    %12 = arith.subf %8, %11 : vector<1x1xf32>
    %13 = math.exp %12 : vector<1x1xf32>
    %14 = vector.broadcast %11 : vector<1x1xf32> to vector<1x128xf32>
    %15 = arith.subf %7, %14 : vector<1x128xf32>
    %16 = math.exp %15 : vector<1x128xf32>
    %c0_9 = arith.constant 0 : index
    %c0_10 = arith.constant 0 : index
    %17 = vector.load %arg7[%c0_9, %c0_10] : memref<1x1xf32, #tpu.memory_space<vmem>>, vector<1x1xf32>
    %18 = arith.mulf %13, %17 : vector<1x1xf32>
    %cst_11 = arith.constant dense<0.000000e+00> : vector<1xf32>
    %19 = vector.multi_reduction <add>, %16, %cst_11 [1] : vector<1x128xf32> to vector<1xf32>
    %20 = vector.shape_cast %19 : vector<1xf32> to vector<1x1xf32>
    %21 = arith.addf %18, %20 : vector<1x1xf32>
    %c0_12 = arith.constant 0 : index
    %c0_13 = arith.constant 0 : index
    %22 = vector.load %arg7[%c0_12, %c0_13] : memref<1x1xf32, #tpu.memory_space<vmem>>, vector<1x1xf32>
    tpu.vector_store %arg7[%c0_12, %c0_13], %21 {strides = array<i32>} : memref<1x1xf32, #tpu.memory_space<vmem>>, vector<1x1xf32>,
    %c0_14 = arith.constant 0 : index
    %c0_15 = arith.constant 0 : index
    %23 = vector.load %arg8[%c0_14, %c0_15] : memref<1x128xf32, #tpu.memory_space<vmem>>, vector<1x128xf32>
    %24 = vector.broadcast %13 : vector<1x1xf32> to vector<1x128xf32>
    %25 = arith.mulf %24, %23 : vector<1x128xf32>
    %c0_16 = arith.constant 0 : index
    %c0_17 = arith.constant 0 : index
    %26 = vector.load %arg2[%c0_16, %c0_17] : memref<128x128xf32, #tpu.memory_space<vmem>>, vector<128x128xf32>
    %cst_18 = arith.constant dense<0.000000e+00> : vector<1x128xf32>
    %27 = tpu.matmul %16, %26, %cst_18 {dimension_numbers = #tpu.dot_dimension_numbers<[1], [0], [0], [1], [0, 0, 1, 1], [], []>} : vector<1x128xf32>, vector<128x128xf32>, vector<1x128xf32> -> vector<1x128xf32>
    %28 = arith.addf %25, %27 : vector<1x128xf32>
    %c0_19 = arith.constant 0 : index
    %c0_20 = arith.constant 0 : index
    %29 = vector.load %arg8[%c0_19, %c0_20] : memref<1x128xf32, #tpu.memory_space<vmem>>, vector<1x128xf32>
    tpu.vector_store %arg8[%c0_19, %c0_20], %28 {strides = array<i32>} : memref<1x128xf32, #tpu.memory_space<vmem>>, vector<1x128xf32>,
    %c0_21 = arith.constant 0 : index
    %c0_22 = arith.constant 0 : index
    %30 = vector.load %arg6[%c0_21, %c0_22] : memref<1x1xf32, #tpu.memory_space<vmem>>, vector<1x1xf32>
    tpu.vector_store %arg6[%c0_21, %c0_22], %11 {strides = array<i32>} : memref<1x1xf32, #tpu.memory_space<vmem>>, vector<1x1xf32>,
    %c0_i32_23 = arith.constant 0 : i32
    %31 = arith.cmpi eq, %arg0, %c0_i32_23 : i32
    %32 = arith.extui %31 : i1 to i32
    %c0_i32_24 = arith.constant 0 : i32
    %33 = arith.cmpi ne, %32, %c0_i32_24 : i32
    scf.if %33 {
      %c0_25 = arith.constant 0 : index
      %c0_26 = arith.constant 0 : index
      %34 = vector.load %arg8[%c0_25, %c0_26] : memref<1x128xf32, #tpu.memory_space<vmem>>, vector<1x128xf32>
      %c0_27 = arith.constant 0 : index
      %c0_28 = arith.constant 0 : index
      %35 = vector.load %arg7[%c0_27, %c0_28] : memref<1x1xf32, #tpu.memory_space<vmem>>, vector<1x1xf32>
      %36 = tpu.reciprocal %35 {approx = true} : vector<1x1xf32> -> vector<1x1xf32>
      %37 = vector.broadcast %36 : vector<1x1xf32> to vector<1x128xf32>
      %38 = arith.mulf %34, %37 : vector<1x128xf32>
      %c0_29 = arith.constant 0 : index
      %c0_30 = arith.constant 0 : index
      %39 = vector.load %arg4[%c0_29, %c0_30] : memref<128x128xf32, #tpu.memory_space<vmem>>, vector<128x128xf32>
      %cst_31 = arith.constant dense<0.000000e+00> : vector<1x128xf32>
      %40 = tpu.matmul %38, %39, %cst_31 {dimension_numbers = #tpu.dot_dimension_numbers<[1], [0], [0], [1], [0, 0, 1, 1], [], []>} : vector<1x128xf32>, vector<128x128xf32>, vector<1x128xf32> -> vector<1x128xf32>
      %c0_32 = arith.constant 0 : index
      %c0_33 = arith.constant 0 : index
      %41 = vector.load %arg5[%c0_32, %c0_33] : memref<1x128xf32, #tpu.memory_space<vmem>>, vector<1x128xf32>
      tpu.vector_store %arg5[%c0_32, %c0_33], %40 {strides = array<i32>} : memref<1x128xf32, #tpu.memory_space<vmem>>, vector<1x128xf32>,
    } else {
    }
    return
  }
  func.func @transform_0(%arg0: i32) -> (i32, i32) {
    %c0_i32 = arith.constant 0 : i32
    %c0_i32_0 = arith.constant 0 : i32
    %c0_i32_1 = arith.constant 0 : i32
    return %c0_i32, %c0_i32_0 : i32, i32
  }
  func.func @transform_1(%arg0: i32) -> (i32, i32) {
    %c0_i32 = arith.constant 0 : i32
    %c0_i32_0 = arith.constant 0 : i32
    return %arg0, %c0_i32 : i32, i32
  }
  func.func @transform_2(%arg0: i32) -> (i32, i32) {
    %c0_i32 = arith.constant 0 : i32
    %c0_i32_0 = arith.constant 0 : i32
    return %c0_i32, %arg0 : i32, i32
  }
  func.func @transform_3(%arg0: i32) -> (i32, i32) {
    %c0_i32 = arith.constant 0 : i32
    %c0_i32_0 = arith.constant 0 : i32
    %c0_i32_1 = arith.constant 0 : i32
    return %c0_i32, %c0_i32_0 : i32, i32
  }
  func.func @transform_4(%arg0: i32) -> (i32, i32) {
    %c0_i32 = arith.constant 0 : i32
    %c0_i32_0 = arith.constant 0 : i32
    %c0_i32_1 = arith.constant 0 : i32
    return %c0_i32, %c0_i32_0 : i32, i32
  }
}

</mosaic_0001>

<llo_original>
// kernel: tpu_custom_call.1
$region0: #{tpu_custom_call.1}
  #allocation0 [shape = 'u32[]', space=smem, size = 0x4, offset = 0x4, fixed_abs, tag = 'smem constant byte address 0x4 - core index']
  #allocation1 [shape = 'u32[144,128]{1,0:T(1,128)}', space=vmem, size = 0x12000, scoped, tag = 'internal scratch']
  #allocation2 [shape = 'f32[1,1]{1,0:T(1,128)}', space=vmem, size = 0x200, scoped, tag = 'scratch operand']
  #allocation3 [shape = 'f32[1,1]{1,0:T(1,128)}', space=vmem, size = 0x200, scoped, tag = 'scratch operand']
  #allocation4 [shape = 'f32[1,128]{1,0:T(1,128)}', space=vmem, size = 0x200, scoped, tag = 'scratch operand']
  %s0 = inlined_call_operand.hbm [shape: f32[1,128], index: 0, kind: input, shape index: {}]
  %s1 = inlined_call_operand.hbm [shape: f32[128,128], index: 1, kind: input, shape index: {}]
  %s2 = inlined_call_operand.vmem [shape: f32[1,128], index: 2, kind: input, shape index: {}]
  %s3 = inlined_call_operand.hbm [shape: f32[128,128], index: 3, kind: input, shape index: {}]
  %s4 = inlined_call_operand.hbm [shape: f32[1,128], index: 4, kind: output, shape index: {}]
  %s5 = sld [smem:[#allocation0]]
  $region46: #{tpu_custom_call.1} parent=0
    _
  %s7 = ssub.s32 1, %s5
  %s8 = scalar_select 0, %s7, %s5
  $region1: #{tpu_custom_call.1} parent=0
    #allocation5 [shape = 'u8[512]{0}', space=vmem, size = 0x400, scoped, tag = 'input window, operand 0, single buffered']
    #allocation6 [shape = 's32[1]{0}', space=sflag, size = 0x4, scoped, tag = 'scoped memory for tpu_custom_call.1']
    #allocation7 [shape = 's32[1]{0}', space=sflag, size = 0x4, scoped, tag = 'scoped memory for tpu_custom_call.1']
    #allocation8 [shape = 'u8[65536]{0}', space=vmem, size = 0x10000, scoped, tag = 'input window, operand 1, single buffered']
    #allocation9 [shape = 's32[1]{0}', space=sflag, size = 0x4, scoped, tag = 'scoped memory for tpu_custom_call.1']
    #allocation10 [shape = 'u8[65536]{0}', space=vmem, size = 0x10000, scoped, tag = 'input window, operand 3, single buffered']
    #allocation11 [shape = 'u8[512]{0}', space=vmem, size = 0x400, scoped, tag = 'output window, operand 0, single buffered']
    %9 = vsyncpa [#allocation6], 0
    %10 = vsyncpa [#allocation9], 0
    %11 = vsyncpa [#allocation7], 0
    // Predicated region
    $region2: #{tpu_custom_call.1} parent=1 // pred_check
      _
    $region3: #{tpu_custom_call.1} parent=1 // pred_check_branch
      %13 = sbr.rel (0) target = $region5
    $region4: #{tpu_custom_call.1} parent=1 // pred_region
      %s15 = ssub.s32 16, 16
      %16 = vsyncadd [#allocation6], %s15
      %s18 = sshll.u32 [#allocation5], 4
      %s19 = int_to_ptr.vmem [resolvable:$true] %s18
      %21 = dma.hbm_to_vmem [thread:$0]  %s0, 16, %s19, [#allocation6]
    $region5: #{tpu_custom_call.1} parent=1 // pred_fallthru
      _
    // Predicated region
    $region6: #{tpu_custom_call.1} parent=1 // pred_check
      _
    $region7: #{tpu_custom_call.1} parent=1 // pred_check_branch
      %23 = sbr.rel (0) target = $region9
    $region8: #{tpu_custom_call.1} parent=1 // pred_region
      %s25 = ssub.s32 2048, 2048
      %26 = vsyncadd [#allocation9], %s25
      %s27 = sshll.u32 [#allocation8], 4
      %s28 = int_to_ptr.vmem [resolvable:$true] %s27
      %33 = dma.hbm_to_vmem [thread:$0]  %s1, 2048, %s28, [#allocation9], 128, 128, 8
    $region9: #{tpu_custom_call.1} parent=1 // pred_fallthru
      _
    // Predicated region
    $region10: #{tpu_custom_call.1} parent=1 // pred_check
      _
    $region11: #{tpu_custom_call.1} parent=1 // pred_check_branch
      %35 = sbr.rel (0) target = $region13
    $region12: #{tpu_custom_call.1} parent=1 // pred_region
      _
    $region13: #{tpu_custom_call.1} parent=1 // pred_fallthru
      _
    // Predicated region
    $region14: #{tpu_custom_call.1} parent=1 // pred_check
      _
    $region15: #{tpu_custom_call.1} parent=1 // pred_check_branch
      %37 = sbr.rel (0) target = $region17
    $region16: #{tpu_custom_call.1} parent=1 // pred_region
      %s39 = ssub.s32 2048, 2048
      %40 = vsyncadd [#allocation9], %s39
      %s41 = sshll.u32 [#allocation10], 4
      %s42 = int_to_ptr.vmem [resolvable:$true] %s41
      %47 = dma.hbm_to_vmem [thread:$0]  %s3, 2048, %s42, [#allocation9], 128, 128, 8
    $region17: #{tpu_custom_call.1} parent=1 // pred_fallthru
      _
    // Predicated region
    $region18: #{tpu_custom_call.1} parent=1 // pred_check
      _
    $region19: #{tpu_custom_call.1} parent=1 // pred_check_branch
      %49 = sbr.rel (0) target = $region21
    $region20: #{tpu_custom_call.1} parent=1 // pred_region
      %50 = dma.done [#allocation6], 16
    $region21: #{tpu_custom_call.1} parent=1 // pred_fallthru
      _
    // Predicated region
    $region22: #{tpu_custom_call.1} parent=1 // pred_check
      _
    $region23: #{tpu_custom_call.1} parent=1 // pred_check_branch
      %52 = sbr.rel (0) target = $region25
    $region24: #{tpu_custom_call.1} parent=1 // pred_region
      %53 = dma.done [#allocation9], 2048
    $region25: #{tpu_custom_call.1} parent=1 // pred_fallthru
      _
    // Predicated region
    $region26: #{tpu_custom_call.1} parent=1 // pred_check
      _
    $region27: #{tpu_custom_call.1} parent=1 // pred_check_branch
      %55 = sbr.rel (0) target = $region29
    $region28: #{tpu_custom_call.1} parent=1 // pred_region
      %56 = dma.done [#allocation9], 2048
    $region29: #{tpu_custom_call.1} parent=1 // pred_fallthru
      _
    %p57 = scmp.eq.s32.totalorder 0, 0
    // Predicated region
    $region30: #{tpu_custom_call.1} parent=1 // pred_check
      %p58 = pneg %p57
    $region31: #{tpu_custom_call.1} parent=1 // pred_check_branch
      %60 = sbr.rel (%p58) target = $region33
    $region32: #{tpu_custom_call.1} parent=1 // pred_region
      %vm61 = vcmask 0
      %62 = vst.msk [vmem:[#allocation2] sm:$0x1] %vm61, -inf
      %63 = vst.msk [vmem:[#allocation3] sm:$0x1] %vm61, 0.0
      %64 = vst [vmem:[#allocation4] sm:$0x1] 0.0
    $region33: #{tpu_custom_call.1} parent=1 // pred_fallthru
      _
    %v65 = vld [vmem:[#allocation5] sm:$0x1]
    %v66 = vld [vmem:[#allocation8] sm:$0xff]
    %v67 = vld [vmem:[#allocation8 + $0x8] sm:$0xff]
    %v68 = vld [vmem:[#allocation8 + $0x10] sm:$0xff]
    %v69 = vld [vmem:[#allocation8 + $0x18] sm:$0xff]
    %v70 = vld [vmem:[#allocation8 + $0x20] sm:$0xff]
    %v71 = vld [vmem:[#allocation8 + $0x28] sm:$0xff]
    %v72 = vld [vmem:[#allocation8 + $0x30] sm:$0xff]
    %v73 = vld [vmem:[#allocation8 + $0x38] sm:$0xff]
    %v74 = vld [vmem:[#allocation8 + $0x40] sm:$0xff]
    %v75 = vld [vmem:[#allocation8 + $0x48] sm:$0xff]
    %v76 = vld [vmem:[#allocation8 + $0x50] sm:$0xff]
    %v77 = vld [vmem:[#allocation8 + $0x58] sm:$0xff]
    %v78 = vld [vmem:[#allocation8 + $0x60] sm:$0xff]
    %v79 = vld [vmem:[#allocation8 + $0x68] sm:$0xff]
    %v80 = vld [vmem:[#allocation8 + $0x70] sm:$0xff]
    %v81 = vld [vmem:[#allocation8 + $0x78] sm:$0xff]
    %v82 = vld [vmem:[%s2] sm:$0x1]
    %83 = vmatprep.subr.mxu0 0.0
    %84 = vmatpush1.xpose.msra.mxu0 %v66
    %85 = vmatprep.subr.mxu0 0.0
    %86 = vmatpush1.xpose.msra.mxu0 %v67
    %87 = vmatprep.subr.mxu0 0.0
    %88 = vmatpush1.xpose.msra.mxu0 %v68
    %89 = vmatprep.subr.mxu0 0.0
    %90 = vmatpush1.xpose.msra.mxu0 %v69
    %91 = vmatprep.subr.mxu0 0.0
    %92 = vmatpush1.xpose.msra.mxu0 %v70
    %93 = vmatprep.subr.mxu0 0.0
    %94 = vmatpush1.xpose.msra.mxu0 %v71
    %95 = vmatprep.subr.mxu0 0.0
    %96 = vmatpush1.xpose.msra.mxu0 %v72
    %97 = vmatprep.subr.mxu0 0.0
    %98 = vmatpush1.xpose.msra.mxu0 %v73
    %99 = vmatprep.subr.mxu0 0.0
    %100 = vmatpush1.xpose.msra.mxu0 %v74
    %101 = vmatprep.subr.mxu0 0.0
    %102 = vmatpush1.xpose.msra.mxu0 %v75
    %103 = vmatprep.subr.mxu0 0.0
    %104 = vmatpush1.xpose.msra.mxu0 %v76
    %105 = vmatprep.subr.mxu0 0.0
    %106 = vmatpush1.xpose.msra.mxu0 %v77
    %107 = vmatprep.subr.mxu0 0.0
    %108 = vmatpush1.xpose.msra.mxu0 %v78
    %109 = vmatprep.subr.mxu0 0.0
    %110 = vmatpush1.xpose.msra.mxu0 %v79
    %111 = vmatprep.subr.mxu0 0.0
    %112 = vmatpush1.xpose.msra.mxu0 %v80
    %113 = vmatprep.subr.mxu0 0.0
    %114 = vmatpush1.xpose.msra.mxu0 %v81
    %115 = vmatprep.subr.mxu0 0.0
    %116 = vmatpush1.xpose.msra.mxu0 0.0
    %117 = vmatprep.subr.mxu0 0.0
    %118 = vmatpush1.xpose.msra.mxu0 0.0
    %119 = vmatprep.subr.mxu0 0.0
    %120 = vmatpush1.xpose.msra.mxu0 0.0
    %121 = vmatprep.subr.mxu0 0.0
    %122 = vmatpush1.xpose.msra.mxu0 0.0
    %123 = vmatprep.subr.mxu0 0.0
    %124 = vmatpush1.xpose.msra.mxu0 0.0
    %125 = vmatprep.subr.mxu0 0.0
    %126 = vmatpush1.xpose.msra.mxu0 0.0
    %127 = vmatprep.subr.mxu0 0.0
    %128 = vmatpush1.xpose.msra.mxu0 0.0
    %129 = vmatprep.subr.mxu0 0.0
    %130 = vmatpush1.xpose.msra.mxu0 0.0
    %131 = vmatprep.subr.mxu0 0.0
    %132 = vmatpush1.xpose.msra.mxu0 0.0
    %133 = vmatprep.subr.mxu0 0.0
    %134 = vmatpush1.xpose.msra.mxu0 0.0
    %135 = vmatprep.subr.mxu0 0.0
    %136 = vmatpush1.xpose.msra.mxu0 0.0
    %137 = vmatprep.subr.mxu0 0.0
    %138 = vmatpush1.xpose.msra.mxu0 0.0
    %139 = vmatprep.subr.mxu0 0.0
    %140 = vmatpush1.xpose.msra.mxu0 0.0
    %141 = vmatprep.subr.mxu0 0.0
    %142 = vmatpush1.xpose.msra.mxu0 0.0
    %143 = vmatprep.subr.mxu0 0.0
    %144 = vmatpush1.xpose.msra.mxu0 0.0
    %145 = vmatprep.subr.mxu0 0.0
    %146 = vmatpush1.xpose.msra.mxu0 0.0
    %147 = vmatprep.mubr.f32.mxu0 0.0
    %148 = vmatmul.mubr.f32.gmra.mrb[0].mxu0 %v65
    %v149 = vpop.f32.mrb[0].mxu0
    %v150 = vadd.f32 %v82, %v149
    %v151 = vpop.f32.mrb[0].mxu0
    %152 = vdwg.mxu0
    %v153 = vld [vmem:[#allocation2] sm:$0x1]
    %vm154 = vcmask 1040384
    %v155 = vsel %vm154, %v150, -inf
    %156 = vmax.xlane.f32.xlu0 %v155
    %v157 = vpop.xlane.xlu0 %156
    %v158 = vmax.f32 %v153, %v157
    %v159 = vsub.f32 %v153, %v158
    %v160 = vmul.f32 %v159, 1.442695
    %v161 = vpow.pop %v160
    %163 = vset.pattern.permute.xlu0 0
    %164 = vperm.xlu0 %163, %v158
    %v165 = vpop.permute.xlu0 %164
    %v167 = vlaneseq
    %v168 = vshrl.u32 %v167, 7
    %v169 = vsub.s32 0, %v168
    %v170 = vrot.slane %v165, %v169
    %v171 = vsub.f32 %v150, %v170
    %v172 = vmul.f32 %v171, 1.442695
    %v173 = vpow.pop %v172
    %v174 = vld [vmem:[#allocation3] sm:$0x1]
    %v175 = vmul.f32 %v161, %v174
    %v176 = vsel %vm154, %v173, 0.0
    %177 = vadd.xlane.f32.xlu0 %v176
    %v178 = vpop.xlane.xlu0 %177
    %v179 = vadd.f32 %v175, %v178
    %vm180 = vcmask 0
    %181 = vst.msk [vmem:[#allocation3] sm:$0x1] %vm180, %v179
    %v182 = vld [vmem:[#allocation4] sm:$0x1]
    %184 = vset.pattern.permute.xlu0 0
    %185 = vperm.xlu0 %184, %v161
    %v186 = vpop.permute.xlu0 %185
    %v188 = vlaneseq
    %v189 = vshrl.u32 %v188, 7
    %v190 = vsub.s32 0, %v189
    %v191 = vrot.slane %v186, %v190
    %v192 = vmul.f32 %v191, %v182
    %v193 = vld [vmem:[#allocation8] sm:$0xff]
    %v194 = vld [vmem:[#allocation8 + $0x8] sm:$0xff]
    %v195 = vld [vmem:[#allocation8 + $0x10] sm:$0xff]
    %v196 = vld [vmem:[#allocation8 + $0x18] sm:$0xff]
    %v197 = vld [vmem:[#allocation8 + $0x20] sm:$0xff]
    %v198 = vld [vmem:[#allocation8 + $0x28] sm:$0xff]
    %v199 = vld [vmem:[#allocation8 + $0x30] sm:$0xff]
    %v200 = vld [vmem:[#allocation8 + $0x38] sm:$0xff]
    %v201 = vld [vmem:[#allocation8 + $0x40] sm:$0xff]
    %v202 = vld [vmem:[#allocation8 + $0x48] sm:$0xff]
    %v203 = vld [vmem:[#allocation8 + $0x50] sm:$0xff]
    %v204 = vld [vmem:[#allocation8 + $0x58] sm:$0xff]
    %v205 = vld [vmem:[#allocation8 + $0x60] sm:$0xff]
    %v206 = vld [vmem:[#allocation8 + $0x68] sm:$0xff]
    %v207 = vld [vmem:[#allocation8 + $0x70] sm:$0xff]
    %v208 = vld [vmem:[#allocation8 + $0x78] sm:$0xff]
    %209 = vmatprep.subr.mxu0 0.0
    %210 = vmatpush1.msra.mxu0 %v193
    %211 = vmatprep.subr.mxu0 0.0
    %212 = vmatpush1.msra.mxu0 %v194
    %213 = vmatprep.subr.mxu0 0.0
    %214 = vmatpush1.msra.mxu0 %v195
    %215 = vmatprep.subr.mxu0 0.0
    %216 = vmatpush1.msra.mxu0 %v196
    %217 = vmatprep.subr.mxu0 0.0
    %218 = vmatpush1.msra.mxu0 %v197
    %219 = vmatprep.subr.mxu0 0.0
    %220 = vmatpush1.msra.mxu0 %v198
    %221 = vmatprep.subr.mxu0 0.0
    %222 = vmatpush1.msra.mxu0 %v199
    %223 = vmatprep.subr.mxu0 0.0
    %224 = vmatpush1.msra.mxu0 %v200
    %225 = vmatprep.subr.mxu0 0.0
    %226 = vmatpush1.msra.mxu0 %v201
    %227 = vmatprep.subr.mxu0 0.0
    %228 = vmatpush1.msra.mxu0 %v202
    %229 = vmatprep.subr.mxu0 0.0
    %230 = vmatpush1.msra.mxu0 %v203
    %231 = vmatprep.subr.mxu0 0.0
    %232 = vmatpush1.msra.mxu0 %v204
    %233 = vmatprep.subr.mxu0 0.0
    %234 = vmatpush1.msra.mxu0 %v205
    %235 = vmatprep.subr.mxu0 0.0
    %236 = vmatpush1.msra.mxu0 %v206
    %237 = vmatprep.subr.mxu0 0.0
    %238 = vmatpush1.msra.mxu0 %v207
    %239 = vmatprep.subr.mxu0 0.0
    %240 = vmatpush1.msra.mxu0 %v208
    %241 = vmatprep.subr.mxu0 0.0
    %242 = vmatpush1.msra.mxu0 0.0
    %243 = vmatprep.subr.mxu0 0.0
    %244 = vmatpush1.msra.mxu0 0.0
    %245 = vmatprep.subr.mxu0 0.0
    %246 = vmatpush1.msra.mxu0 0.0
    %247 = vmatprep.subr.mxu0 0.0
    %248 = vmatpush1.msra.mxu0 0.0
    %249 = vmatprep.subr.mxu0 0.0
    %250 = vmatpush1.msra.mxu0 0.0
    %251 = vmatprep.subr.mxu0 0.0
    %252 = vmatpush1.msra.mxu0 0.0
    %253 = vmatprep.subr.mxu0 0.0
    %254 = vmatpush1.msra.mxu0 0.0
    %255 = vmatprep.subr.mxu0 0.0
    %256 = vmatpush1.msra.mxu0 0.0
    %257 = vmatprep.subr.mxu0 0.0
    %258 = vmatpush1.msra.mxu0 0.0
    %259 = vmatprep.subr.mxu0 0.0
    %260 = vmatpush1.msra.mxu0 0.0
    %261 = vmatprep.subr.mxu0 0.0
    %262 = vmatpush1.msra.mxu0 0.0
    %263 = vmatprep.subr.mxu0 0.0
    %264 = vmatpush1.msra.mxu0 0.0
    %265 = vmatprep.subr.mxu0 0.0
    %266 = vmatpush1.msra.mxu0 0.0
    %267 = vmatprep.subr.mxu0 0.0
    %268 = vmatpush1.msra.mxu0 0.0
    %269 = vmatprep.subr.mxu0 0.0
    %270 = vmatpush1.msra.mxu0 0.0
    %271 = vmatprep.subr.mxu0 0.0
    %272 = vmatpush1.msra.mxu0 0.0
    %273 = vmatprep.mubr.f32.mxu0 0.0
    %274 = vmatmul.mubr.f32.gmra.mrb[0].mxu0 %v173
    %v275 = vpop.f32.mrb[0].mxu0
    %v276 = vadd.f32 0.0, %v275
    %v277 = vpop.f32.mrb[0].mxu0
    %278 = vdwg.mxu0
    %v279 = vadd.f32 %v192, %v276
    %280 = vst [vmem:[#allocation4] sm:$0x1] %v279
    %281 = vst.msk [vmem:[#allocation2] sm:$0x1] %vm180, %v158
    // Predicated region
    $region34: #{tpu_custom_call.1} parent=1 // pred_check
      %p282 = pneg %p57
    $region35: #{tpu_custom_call.1} parent=1 // pred_check_branch
      %284 = sbr.rel (%p282) target = $region37
    $region36: #{tpu_custom_call.1} parent=1 // pred_region
      %v285 = vld [vmem:[#allocation4] sm:$0x1]
      %v286 = vld [vmem:[#allocation3] sm:$0x1]
      %v287 = vrcp.pop %v286
      %289 = vset.pattern.permute.xlu0 0
      %290 = vperm.xlu0 %289, %v287
      %v291 = vpop.permute.xlu0 %290
      %v293 = vlaneseq
      %v294 = vshrl.u32 %v293, 7
      %v295 = vsub.s32 0, %v294
      %v296 = vrot.slane %v291, %v295
      %v297 = vmul.f32 %v285, %v296
      %v298 = vld [vmem:[#allocation10] sm:$0xff]
      %v299 = vld [vmem:[#allocation10 + $0x8] sm:$0xff]
      %v300 = vld [vmem:[#allocation10 + $0x10] sm:$0xff]
      %v301 = vld [vmem:[#allocation10 + $0x18] sm:$0xff]
      %v302 = vld [vmem:[#allocation10 + $0x20] sm:$0xff]
      %v303 = vld [vmem:[#allocation10 + $0x28] sm:$0xff]
      %v304 = vld [vmem:[#allocation10 + $0x30] sm:$0xff]
      %v305 = vld [vmem:[#allocation10 + $0x38] sm:$0xff]
      %v306 = vld [vmem:[#allocation10 + $0x40] sm:$0xff]
      %v307 = vld [vmem:[#allocation10 + $0x48] sm:$0xff]
      %v308 = vld [vmem:[#allocation10 + $0x50] sm:$0xff]
      %v309 = vld [vmem:[#allocation10 + $0x58] sm:$0xff]
      %v310 = vld [vmem:[#allocation10 + $0x60] sm:$0xff]
      %v311 = vld [vmem:[#allocation10 + $0x68] sm:$0xff]
      %v312 = vld [vmem:[#allocation10 + $0x70] sm:$0xff]
      %v313 = vld [vmem:[#allocation10 + $0x78] sm:$0xff]
      %314 = vmatprep.subr.mxu0 0.0
      %315 = vmatpush1.msra.mxu0 %v298
      %316 = vmatprep.subr.mxu0 0.0
      %317 = vmatpush1.msra.mxu0 %v299
      %318 = vmatprep.subr.mxu0 0.0
      %319 = vmatpush1.msra.mxu0 %v300
      %320 = vmatprep.subr.mxu0 0.0
      %321 = vmatpush1.msra.mxu0 %v301
      %322 = vmatprep.subr.mxu0 0.0
      %323 = vmatpush1.msra.mxu0 %v302
      %324 = vmatprep.subr.mxu0 0.0
      %325 = vmatpush1.msra.mxu0 %v303
      %326 = vmatprep.subr.mxu0 0.0
      %327 = vmatpush1.msra.mxu0 %v304
      %328 = vmatprep.subr.mxu0 0.0
      %329 = vmatpush1.msra.mxu0 %v305
      %330 = vmatprep.subr.mxu0 0.0
      %331 = vmatpush1.msra.mxu0 %v306
      %332 = vmatprep.subr.mxu0 0.0
      %333 = vmatpush1.msra.mxu0 %v307
      %334 = vmatprep.subr.mxu0 0.0
      %335 = vmatpush1.msra.mxu0 %v308
      %336 = vmatprep.subr.mxu0 0.0
      %337 = vmatpush1.msra.mxu0 %v309
      %338 = vmatprep.subr.mxu0 0.0
      %339 = vmatpush1.msra.mxu0 %v310
      %340 = vmatprep.subr.mxu0 0.0
      %341 = vmatpush1.msra.mxu0 %v311
      %342 = vmatprep.subr.mxu0 0.0
      %343 = vmatpush1.msra.mxu0 %v312
      %344 = vmatprep.subr.mxu0 0.0
      %345 = vmatpush1.msra.mxu0 %v313
      %346 = vmatprep.subr.mxu0 0.0
      %347 = vmatpush1.msra.mxu0 0.0
      %348 = vmatprep.subr.mxu0 0.0
      %349 = vmatpush1.msra.mxu0 0.0
      %350 = vmatprep.subr.mxu0 0.0
      %351 = vmatpush1.msra.mxu0 0.0
      %352 = vmatprep.subr.mxu0 0.0
      %353 = vmatpush1.msra.mxu0 0.0
      %354 = vmatprep.subr.mxu0 0.0
      %355 = vmatpush1.msra.mxu0 0.0
      %356 = vmatprep.subr.mxu0 0.0
      %357 = vmatpush1.msra.mxu0 0.0
      %358 = vmatprep.subr.mxu0 0.0
      %359 = vmatpush1.msra.mxu0 0.0
      %360 = vmatprep.subr.mxu0 0.0
      %361 = vmatpush1.msra.mxu0 0.0
      %362 = vmatprep.subr.mxu0 0.0
      %363 = vmatpush1.msra.mxu0 0.0
      %364 = vmatprep.subr.mxu0 0.0
      %365 = vmatpush1.msra.mxu0 0.0
      %366 = vmatprep.subr.mxu0 0.0
      %367 = vmatpush1.msra.mxu0 0.0
      %368 = vmatprep.subr.mxu0 0.0
      %369 = vmatpush1.msra.mxu0 0.0
      %370 = vmatprep.subr.mxu0 0.0
      %371 = vmatpush1.msra.mxu0 0.0
      %372 = vmatprep.subr.mxu0 0.0
      %373 = vmatpush1.msra.mxu0 0.0
      %374 = vmatprep.subr.mxu0 0.0
      %375 = vmatpush1.msra.mxu0 0.0
      %376 = vmatprep.subr.mxu0 0.0
      %377 = vmatpush1.msra.mxu0 0.0
      %378 = vmatprep.mubr.f32.mxu0 0.0
      %379 = vmatmul.mubr.f32.gmra.mrb[0].mxu0 %v297
      %v380 = vpop.f32.mrb[0].mxu0
      %v381 = vadd.f32 0.0, %v380
      %v382 = vpop.f32.mrb[0].mxu0
      %383 = vdwg.mxu0
      %384 = vst [vmem:[#allocation11] sm:$0x1] %v381
    $region37: #{tpu_custom_call.1} parent=1 // pred_fallthru
      _
    // Predicated region
    $region38: #{tpu_custom_call.1} parent=1 // pred_check
      _
    $region39: #{tpu_custom_call.1} parent=1 // pred_check_branch
      %386 = sbr.rel (0) target = $region41
    $region40: #{tpu_custom_call.1} parent=1 // pred_region
      %s388 = ssub.s32 16, 16
      %389 = vsyncadd [#allocation7], %s388
      %s391 = sshll.u32 [#allocation11], 4
      %s392 = int_to_ptr.vmem [resolvable:$true] %s391
      %394 = dma.vmem_to_hbm [thread:$0]  %s392, 16, %s4, [#allocation7]
    $region41: #{tpu_custom_call.1} parent=1 // pred_fallthru
      _
    // Predicated region
    $region42: #{tpu_custom_call.1} parent=1 // pred_check
      _
    $region43: #{tpu_custom_call.1} parent=1 // pred_check_branch
      %396 = sbr.rel (0) target = $region45
    $region44: #{tpu_custom_call.1} parent=1 // pred_region
      %397 = dma.done [#allocation7], 16
    $region45: #{tpu_custom_call.1} parent=1 // pred_fallthru
      _
    %398 = vsyncpa [#allocation6], 1
    %399 = vsyncpa [#allocation9], 1
    %400 = vsyncpa [#allocation7], 1

</llo_original>
